<compile_context>
chip_gen: v6e
topology: v6e:2x2x1
jax: 0.10.0
libtpu: 0.0.40
codegen_flags: <defaults>
</compile_context>

<pallas_src>
import functools
import math

import jax
import jax.numpy as jnp
from jax.experimental import pallas as pl
from jax.experimental.pallas import tpu as pltpu


def _head_kernel(x_ref, w_ref, b_ref, gamma_ref, beta_ref, o_ref, *, eps):
    # Dense: (tm, H) @ (H, O) on the MXU in native input dtype, f32 accumulate.
    h = jnp.dot(x_ref[...], w_ref[...], preferred_element_type=jnp.float32)
    h = h + b_ref[...]                      # bias is (1, O) f32, broadcasts

    # Exact (erf-based) GELU, matching torch.nn.GELU() defaults.
    # Constants are Python floats so nothing is captured as a jax.Array const.
    inv_sqrt2 = 0.7071067811865476
    h = 0.5 * h * (1.0 + jax.lax.erf(h * inv_sqrt2))

    # LayerNorm over the feature axis (biased variance, like torch).
    mean = jnp.mean(h, axis=-1, keepdims=True)
    centered = h - mean
    var = jnp.mean(centered * centered, axis=-1, keepdims=True)
    y = centered * jax.lax.rsqrt(var + eps)
    y = y * gamma_ref[...] + beta_ref[...]

    o_ref[...] = y.astype(o_ref.dtype)


def prediction_head(hidden_states, weight_t, bias, gamma, beta, *, eps=1e-12, tm=256):
    """hidden_states: (B, S, H); weight_t: (H, O); bias/gamma/beta: (O,).

    Weight-resident layout: fine for hidden sizes up to a few thousand
    (e.g. 768x768 bf16/f32 easily fits VMEM on v5e/v6e/v7x). For very large
    hidden sizes a K-tiled accumulator variant (extra 'arbitrary' grid axis
    over H with a (tm, O) f32 scratch) would be needed; not required here.
    """
    B, S, H = hidden_states.shape
    O = weight_t.shape[1]
    M = B * S

    x2d = hidden_states.reshape(M, H)

    # Pad rows so the grid divides evenly; padded rows are sliced off below.
    n_tiles = pl.cdiv(M, tm)
    m_pad = n_tiles * tm
    if m_pad != M:
        x2d = jnp.pad(x2d, ((0, m_pad - M), (0, 0)))

    b2d = bias.reshape(1, O).astype(jnp.float32)
    g2d = gamma.reshape(1, O).astype(jnp.float32)
    be2d = beta.reshape(1, O).astype(jnp.float32)

    kernel = functools.partial(_head_kernel, eps=float(eps))

    # Note: the weight/bias/gamma/beta BlockSpecs have constant index_maps, so
    # the pipeline re-uses the same VMEM tile each step (they are grid
    # invariant); single-buffering them (pl.Buffered(1)) would only matter for
    # very large resident weights.
    out2d = pl.pallas_call(
        kernel,
        out_shape=jax.ShapeDtypeStruct((m_pad, O), hidden_states.dtype),
        grid_spec=pltpu.PrefetchScalarGridSpec(
            num_scalar_prefetch=0,
            grid=(n_tiles,),
            in_specs=[
                pl.BlockSpec((tm, H), lambda i: (i, 0)),   # x row tile
                pl.BlockSpec((H, O), lambda i: (0, 0)),    # weight (resident)
                pl.BlockSpec((1, O), lambda i: (0, 0)),    # bias
                pl.BlockSpec((1, O), lambda i: (0, 0)),    # LN gamma
                pl.BlockSpec((1, O), lambda i: (0, 0)),    # LN beta
            ],
            out_specs=pl.BlockSpec((tm, O), lambda i: (i, 0)),
        ),
        compiler_params=pltpu.CompilerParams(
            dimension_semantics=("parallel",),
            vmem_limit_bytes=64 * 1024 * 1024,
        ),
    )(x2d, weight_t, b2d, g2d, be2d)

    if m_pad != M:
        out2d = out2d[:M]
    return out2d.reshape(B, S, O)


def _reference(hidden_states, weight_t, bias, gamma, beta, eps=1e-12):
    h = jnp.einsum("bsh,ho->bso", hidden_states.astype(jnp.float32),
                   weight_t.astype(jnp.float32)) + bias
    h = jax.nn.gelu(h, approximate=False)
    mean = jnp.mean(h, axis=-1, keepdims=True)
    var = jnp.mean((h - mean) ** 2, axis=-1, keepdims=True)
    return ((h - mean) * jax.lax.rsqrt(var + eps) * gamma + beta).astype(hidden_states.dtype)


if __name__ == "__main__":
    # Small shapes consistent with the module: batch=2, seq=8, hidden=32,
    # embedding_dim == hidden -> output=32.
    B, S, H = 2, 8, 32
    O = H
    eps = 1e-12

    key = jax.random.PRNGKey(0)
    kx, kw, kb, kg, kbe = jax.random.split(key, 5)

    hidden_states = jax.random.normal(kx, (B, S, H), dtype=jnp.float32)
    # torch.nn.Linear weight is (out, in); pass it transposed as (in, out).
    weight = jax.random.normal(kw, (O, H), dtype=jnp.float32) * (1.0 / math.sqrt(H))
    weight_t = weight.T
    bias = jax.random.normal(kb, (O,), dtype=jnp.float32) * 0.02
    gamma = jnp.ones((O,), dtype=jnp.float32) + 0.01 * jax.random.normal(kg, (O,), dtype=jnp.float32)
    beta = 0.01 * jax.random.normal(kbe, (O,), dtype=jnp.float32)

    out = prediction_head(hidden_states, weight_t, bias, gamma, beta, eps=eps)
    out = jax.block_until_ready(out)

    ref = _reference(hidden_states, weight_t, bias, gamma, beta, eps=eps)
    assert out.shape == (B, S, O)
    assert jnp.allclose(out, ref, atol=1e-4, rtol=1e-4), "mismatch vs reference"

    print("KERNEL_OK")
</pallas_src>

<mosaic_0001>
module attributes {stable_mosaic.version = 11 : i64} {
  func.func @_head_kernel(%arg0: i32, %arg1: memref<256x32xf32, #tpu.memory_space<vmem>>, %arg2: memref<32x32xf32, #tpu.memory_space<vmem>>, %arg3: memref<1x32xf32, #tpu.memory_space<vmem>>, %arg4: memref<1x32xf32, #tpu.memory_space<vmem>>, %arg5: memref<1x32xf32, #tpu.memory_space<vmem>>, %arg6: memref<256x32xf32, #tpu.memory_space<vmem>>) attributes {dimension_semantics = [#tpu.dimension_semantics<parallel>], iteration_bounds = array<i64: 1>, scalar_prefetch = 0 : i64, scratch_operands = 0 : i64, tpu.core_type = #tpu.core_type<tc>, window_params = [{transform_indices = @transform_0, window_bounds = array<i64: 256, 32>}, {pipeline_mode = #tpu.pipeline_mode<synchronous>, transform_indices = @transform_1, window_bounds = array<i64: 32, 32>}, {pipeline_mode = #tpu.pipeline_mode<synchronous>, transform_indices = @transform_2, window_bounds = array<i64: 1, 32>}, {pipeline_mode = #tpu.pipeline_mode<synchronous>, transform_indices = @transform_3, window_bounds = array<i64: 1, 32>}, {pipeline_mode = #tpu.pipeline_mode<synchronous>, transform_indices = @transform_4, window_bounds = array<i64: 1, 32>}, {transform_indices = @transform_5, window_bounds = array<i64: 256, 32>}]} {
    %c0 = arith.constant 0 : index
    %c0_0 = arith.constant 0 : index
    %0 = vector.load %arg1[%c0, %c0_0] : memref<256x32xf32, #tpu.memory_space<vmem>>, vector<256x32xf32>
    %c0_1 = arith.constant 0 : index
    %c0_2 = arith.constant 0 : index
    %1 = vector.load %arg2[%c0_1, %c0_2] : memref<32x32xf32, #tpu.memory_space<vmem>>, vector<32x32xf32>
    %cst = arith.constant dense<0.000000e+00> : vector<256x32xf32>
    %2 = tpu.matmul %0, %1, %cst {dimension_numbers = #tpu.dot_dimension_numbers<[1], [0], [0], [1], [0, 0, 1, 1], [], []>} : vector<256x32xf32>, vector<32x32xf32>, vector<256x32xf32> -> vector<256x32xf32>
    %c0_3 = arith.constant 0 : index
    %c0_4 = arith.constant 0 : index
    %3 = vector.load %arg3[%c0_3, %c0_4] : memref<1x32xf32, #tpu.memory_space<vmem>>, vector<1x32xf32>
    %4 = vector.broadcast %3 : vector<1x32xf32> to vector<256x32xf32>
    %5 = arith.addf %2, %4 : vector<256x32xf32>
    %cst_5 = arith.constant 5.000000e-01 : f32
    %6 = vector.broadcast %cst_5 : f32 to vector<256x32xf32>
    %7 = arith.mulf %6, %5 : vector<256x32xf32>
    %cst_6 = arith.constant 0.707106769 : f32
    %8 = vector.broadcast %cst_6 : f32 to vector<256x32xf32>
    %9 = arith.mulf %5, %8 : vector<256x32xf32>
    %10 = math.erf %9 : vector<256x32xf32>
    %cst_7 = arith.constant 1.000000e+00 : f32
    %11 = vector.broadcast %cst_7 : f32 to vector<256x32xf32>
    %12 = arith.addf %11, %10 : vector<256x32xf32>
    %13 = arith.mulf %7, %12 : vector<256x32xf32>
    %cst_8 = arith.constant dense<0.000000e+00> : vector<256xf32>
    %14 = vector.multi_reduction <add>, %13, %cst_8 [1] : vector<256x32xf32> to vector<256xf32>
    %15 = vector.shape_cast %14 : vector<256xf32> to vector<256x1xf32>
    %cst_9 = arith.constant 3.200000e+01 : f32
    %16 = vector.broadcast %cst_9 : f32 to vector<256x1xf32>
    %17 = arith.divf %15, %16 : vector<256x1xf32>
    %18 = vector.broadcast %17 : vector<256x1xf32> to vector<256x32xf32>
    %19 = arith.subf %13, %18 : vector<256x32xf32>
    %20 = arith.mulf %19, %19 : vector<256x32xf32>
    %cst_10 = arith.constant dense<0.000000e+00> : vector<256xf32>
    %21 = vector.multi_reduction <add>, %20, %cst_10 [1] : vector<256x32xf32> to vector<256xf32>
    %22 = vector.shape_cast %21 : vector<256xf32> to vector<256x1xf32>
    %cst_11 = arith.constant 3.200000e+01 : f32
    %23 = vector.broadcast %cst_11 : f32 to vector<256x1xf32>
    %24 = arith.divf %22, %23 : vector<256x1xf32>
    %cst_12 = arith.constant 9.99999996E-13 : f32
    %25 = vector.broadcast %cst_12 : f32 to vector<256x1xf32>
    %26 = arith.addf %24, %25 : vector<256x1xf32>
    %27 = math.rsqrt %26 : vector<256x1xf32>
    %28 = vector.broadcast %27 : vector<256x1xf32> to vector<256x32xf32>
    %29 = arith.mulf %19, %28 : vector<256x32xf32>
    %c0_13 = arith.constant 0 : index
    %c0_14 = arith.constant 0 : index
    %30 = vector.load %arg4[%c0_13, %c0_14] : memref<1x32xf32, #tpu.memory_space<vmem>>, vector<1x32xf32>
    %31 = vector.broadcast %30 : vector<1x32xf32> to vector<256x32xf32>
    %32 = arith.mulf %29, %31 : vector<256x32xf32>
    %c0_15 = arith.constant 0 : index
    %c0_16 = arith.constant 0 : index
    %33 = vector.load %arg5[%c0_15, %c0_16] : memref<1x32xf32, #tpu.memory_space<vmem>>, vector<1x32xf32>
    %34 = vector.broadcast %33 : vector<1x32xf32> to vector<256x32xf32>
    %35 = arith.addf %32, %34 : vector<256x32xf32>
    %c0_17 = arith.constant 0 : index
    %c0_18 = arith.constant 0 : index
    %36 = vector.load %arg6[%c0_17, %c0_18] : memref<256x32xf32, #tpu.memory_space<vmem>>, vector<256x32xf32>
    tpu.vector_store %arg6[%c0_17, %c0_18], %35 {strides = array<i32>} : memref<256x32xf32, #tpu.memory_space<vmem>>, vector<256x32xf32>,
    return
  }
  func.func @transform_0(%arg0: i32) -> (i32, i32) {
    %c0_i32 = arith.constant 0 : i32
    %c0_i32_0 = arith.constant 0 : i32
    return %arg0, %c0_i32 : i32, i32
  }
  func.func @transform_1(%arg0: i32) -> (i32, i32) {
    %c0_i32 = arith.constant 0 : i32
    %c0_i32_0 = arith.constant 0 : i32
    %c0_i32_1 = arith.constant 0 : i32
    return %c0_i32, %c0_i32_0 : i32, i32
  }
  func.func @transform_2(%arg0: i32) -> (i32, i32) {
    %c0_i32 = arith.constant 0 : i32
    %c0_i32_0 = arith.constant 0 : i32
    %c0_i32_1 = arith.constant 0 : i32
    return %c0_i32, %c0_i32_0 : i32, i32
  }
  func.func @transform_3(%arg0: i32) -> (i32, i32) {
    %c0_i32 = arith.constant 0 : i32
    %c0_i32_0 = arith.constant 0 : i32
    %c0_i32_1 = arith.constant 0 : i32
    return %c0_i32, %c0_i32_0 : i32, i32
  }
  func.func @transform_4(%arg0: i32) -> (i32, i32) {
    %c0_i32 = arith.constant 0 : i32
    %c0_i32_0 = arith.constant 0 : i32
    %c0_i32_1 = arith.constant 0 : i32
    return %c0_i32, %c0_i32_0 : i32, i32
  }
  func.func @transform_5(%arg0: i32) -> (i32, i32) {
    %c0_i32 = arith.constant 0 : i32
    %c0_i32_0 = arith.constant 0 : i32
    return %arg0, %c0_i32 : i32, i32
  }
}

</mosaic_0001>

<llo_original>
// kernel: tpu_custom_call.1
$region0: #{tpu_custom_call.1}
  #allocation0 [shape = 'u32[]', space=smem, size = 0x4, offset = 0x4, fixed_abs, tag = 'smem constant byte address 0x4 - core index']
  #allocation1 [shape = 'u32[144,128]{1,0:T(1,128)}', space=vmem, size = 0x12000, scoped, tag = 'internal scratch']
  %s0 = inlined_call_operand.vmem [shape: f32[256,32], index: 0, kind: input, shape index: {}]
  %s1 = inlined_call_operand.vmem [shape: f32[32,32], index: 1, kind: input, shape index: {}]
  %s2 = inlined_call_operand.vmem [shape: f32[1,32], index: 2, kind: input, shape index: {}]
  %s3 = inlined_call_operand.vmem [shape: f32[1,32], index: 3, kind: input, shape index: {}]
  %s4 = inlined_call_operand.vmem [shape: f32[1,32], index: 4, kind: input, shape index: {}]
  %s5 = inlined_call_operand.vmem [shape: f32[256,32], index: 5, kind: output, shape index: {}]
  %s6 = sld [smem:[#allocation0]]
  $region30: #{tpu_custom_call.1} parent=0
    _
  %s8 = ssub.s32 1, %s6
  %s9 = scalar_select 0, %s8, %s6
  // Predicated region
  $region2: #{tpu_custom_call.1} parent=0 // pred_check
    _
  $region3: #{tpu_custom_call.1} parent=0 // pred_check_branch
    %11 = sbr.rel (0) target = $region5
  $region4: #{tpu_custom_call.1} parent=0 // pred_region
    _
  $region5: #{tpu_custom_call.1} parent=0 // pred_fallthru
    _
  // Predicated region
  $region6: #{tpu_custom_call.1} parent=0 // pred_check
    _
  $region7: #{tpu_custom_call.1} parent=0 // pred_check_branch
    %13 = sbr.rel (0) target = $region9
  $region8: #{tpu_custom_call.1} parent=0 // pred_region
    _
  $region9: #{tpu_custom_call.1} parent=0 // pred_fallthru
    _
  // Predicated region
  $region10: #{tpu_custom_call.1} parent=0 // pred_check
    _
  $region11: #{tpu_custom_call.1} parent=0 // pred_check_branch
    %15 = sbr.rel (0) target = $region13
  $region12: #{tpu_custom_call.1} parent=0 // pred_region
    _
  $region13: #{tpu_custom_call.1} parent=0 // pred_fallthru
    _
  // Predicated region
  $region14: #{tpu_custom_call.1} parent=0 // pred_check
    _
  $region15: #{tpu_custom_call.1} parent=0 // pred_check_branch
    %17 = sbr.rel (0) target = $region17
  $region16: #{tpu_custom_call.1} parent=0 // pred_region
    _
  $region17: #{tpu_custom_call.1} parent=0 // pred_fallthru
    _
  // Predicated region
  $region18: #{tpu_custom_call.1} parent=0 // pred_check
    _
  $region19: #{tpu_custom_call.1} parent=0 // pred_check_branch
    %19 = sbr.rel (0) target = $region21
  $region20: #{tpu_custom_call.1} parent=0 // pred_region
    _
  $region21: #{tpu_custom_call.1} parent=0 // pred_fallthru
    _
  %v20 = vld [vmem:[%s0] sm:$0xff]
  %v21 = vld [vmem:[%s0 + $0x8] sm:$0xff]
  %v22 = vld [vmem:[%s0 + $0x10] sm:$0xff]
  %v23 = vld [vmem:[%s0 + $0x18] sm:$0xff]
  %v24 = vld [vmem:[%s0 + $0x20] sm:$0xff]
  %v25 = vld [vmem:[%s0 + $0x28] sm:$0xff]
  %v26 = vld [vmem:[%s0 + $0x30] sm:$0xff]
  %v27 = vld [vmem:[%s0 + $0x38] sm:$0xff]
  %v28 = vld [vmem:[%s0 + $0x40] sm:$0xff]
  %v29 = vld [vmem:[%s0 + $0x48] sm:$0xff]
  %v30 = vld [vmem:[%s0 + $0x50] sm:$0xff]
  %v31 = vld [vmem:[%s0 + $0x58] sm:$0xff]
  %v32 = vld [vmem:[%s0 + $0x60] sm:$0xff]
  %v33 = vld [vmem:[%s0 + $0x68] sm:$0xff]
  %v34 = vld [vmem:[%s0 + $0x70] sm:$0xff]
  %v35 = vld [vmem:[%s0 + $0x78] sm:$0xff]
  %v36 = vld [vmem:[%s0 + $0x80] sm:$0xff]
  %v37 = vld [vmem:[%s0 + $0x88] sm:$0xff]
  %v38 = vld [vmem:[%s0 + $0x90] sm:$0xff]
  %v39 = vld [vmem:[%s0 + $0x98] sm:$0xff]
  %v40 = vld [vmem:[%s0 + $0xa0] sm:$0xff]
  %v41 = vld [vmem:[%s0 + $0xa8] sm:$0xff]
  %v42 = vld [vmem:[%s0 + $0xb0] sm:$0xff]
  %v43 = vld [vmem:[%s0 + $0xb8] sm:$0xff]
  %v44 = vld [vmem:[%s0 + $0xc0] sm:$0xff]
  %v45 = vld [vmem:[%s0 + $0xc8] sm:$0xff]
  %v46 = vld [vmem:[%s0 + $0xd0] sm:$0xff]
  %v47 = vld [vmem:[%s0 + $0xd8] sm:$0xff]
  %v48 = vld [vmem:[%s0 + $0xe0] sm:$0xff]
  %v49 = vld [vmem:[%s0 + $0xe8] sm:$0xff]
  %v50 = vld [vmem:[%s0 + $0xf0] sm:$0xff]
  %v51 = vld [vmem:[%s0 + $0xf8] sm:$0xff]
  %v52 = vld [vmem:[%s1] sm:$0xff]
  %v53 = vld [vmem:[%s1 + $0x8] sm:$0xff]
  %v54 = vld [vmem:[%s1 + $0x10] sm:$0xff]
  %v55 = vld [vmem:[%s1 + $0x18] sm:$0xff]
  %v56 = vld [vmem:[%s2] sm:$0x1]
  %v58 = vlaneseq
  %v59 = vshrl.u32 %v58, 7
  %v60 = vsub.s32 0, %v59
  %v61 = vrot.slane %v56, %v60
  %vm63 = vcmask 261120
  %v65 = vsel %vm63, %v20, 0
  %v68 = vsel %vm63, %v21, 0
  %v71 = vsel %vm63, %v22, 0
  %v74 = vsel %vm63, %v23, 0
  %v77 = vsel %vm63, %v24, 0
  %v80 = vsel %vm63, %v25, 0
  %v83 = vsel %vm63, %v26, 0
  %v86 = vsel %vm63, %v27, 0
  %v89 = vsel %vm63, %v28, 0
  %v92 = vsel %vm63, %v29, 0
  %v95 = vsel %vm63, %v30, 0
  %v98 = vsel %vm63, %v31, 0
  %v101 = vsel %vm63, %v32, 0
  %v104 = vsel %vm63, %v33, 0
  %v107 = vsel %vm63, %v34, 0
  %v110 = vsel %vm63, %v35, 0
  %v113 = vsel %vm63, %v36, 0
  %v116 = vsel %vm63, %v37, 0
  %v119 = vsel %vm63, %v38, 0
  %v122 = vsel %vm63, %v39, 0
  %v125 = vsel %vm63, %v40, 0
  %v128 = vsel %vm63, %v41, 0
  %v131 = vsel %vm63, %v42, 0
  %v134 = vsel %vm63, %v43, 0
  %v137 = vsel %vm63, %v44, 0
  %v140 = vsel %vm63, %v45, 0
  %v143 = vsel %vm63, %v46, 0
  %v146 = vsel %vm63, %v47, 0
  %v149 = vsel %vm63, %v48, 0
  %v152 = vsel %vm63, %v49, 0
  %v155 = vsel %vm63, %v50, 0
  %v158 = vsel %vm63, %v51, 0
  %160 = vmatprep.subr.mxu0 0.0
  %161 = vmatpush1.msra.mxu0 0.0
  %162 = vmatprep.subr.mxu0 0.0
  %163 = vmatpush1.msra.mxu0 0.0
  %164 = vmatprep.subr.mxu0 0.0
  %165 = vmatpush1.msra.mxu0 0.0
  %166 = vmatprep.subr.mxu0 0.0
  %167 = vmatpush1.msra.mxu0 0.0
  %168 = vmatprep.subr.mxu0 0.0
  %169 = vmatpush1.msra.mxu0 0.0
  %170 = vmatprep.subr.mxu0 0.0
  %171 = vmatpush1.msra.mxu0 0.0
  %172 = vmatprep.subr.mxu0 0.0
  %173 = vmatpush1.msra.mxu0 0.0
  %174 = vmatprep.subr.mxu0 0.0
  %175 = vmatpush1.msra.mxu0 0.0
  %176 = vmatprep.subr.mxu0 0.0
  %177 = vmatpush1.msra.mxu0 0.0
  %178 = vmatprep.subr.mxu0 0.0
  %179 = vmatpush1.msra.mxu0 0.0
  %180 = vmatprep.subr.mxu0 0.0
  %181 = vmatpush1.msra.mxu0 0.0
  %182 = vmatprep.subr.mxu0 0.0
  %183 = vmatpush1.msra.mxu0 0.0
  %184 = vmatprep.subr.mxu0 0.0
  %185 = vmatpush1.msra.mxu0 %v55
  %186 = vmatprep.subr.mxu0 0.0
  %187 = vmatpush1.msra.mxu0 %v54
  %188 = vmatprep.subr.mxu0 0.0
  %189 = vmatpush1.msra.mxu0 %v53
  %190 = vmatprep.subr.mxu0 0.0
  %191 = vmatpush1.msra.mxu0 %v52
  %192 = vmatprep.subr.mxu0 0.0
  %193 = vmatpush2.msra.mxu0 0.0
  %194 = vmatprep.subr.mxu0 0.0
  %195 = vmatpush2.msra.mxu0 0.0
  %196 = vmatprep.subr.mxu0 0.0
  %197 = vmatpush2.msra.mxu0 0.0
  %198 = vmatprep.subr.mxu0 0.0
  %199 = vmatpush2.msra.mxu0 0.0
  %200 = vmatprep.subr.mxu0 0.0
  %201 = vmatpush2.msra.mxu0 0.0
  %202 = vmatprep.subr.mxu0 0.0
  %203 = vmatpush2.msra.mxu0 0.0
  %204 = vmatprep.subr.mxu0 0.0
  %205 = vmatpush2.msra.mxu0 0.0
  %206 = vmatprep.subr.mxu0 0.0
  %207 = vmatpush2.msra.mxu0 0.0
  %208 = vmatprep.subr.mxu0 0.0
  %209 = vmatpush2.msra.mxu0 0.0
  %210 = vmatprep.subr.mxu0 0.0
  %211 = vmatpush2.msra.mxu0 0.0
  %212 = vmatprep.subr.mxu0 0.0
  %213 = vmatpush2.msra.mxu0 0.0
  %214 = vmatprep.subr.mxu0 0.0
  %215 = vmatpush2.msra.mxu0 0.0
  %216 = vmatprep.subr.mxu0 0.0
  %217 = vmatpush2.msra.mxu0 0.0
  %218 = vmatprep.subr.mxu0 0.0
  %219 = vmatpush2.msra.mxu0 0.0
  %220 = vmatprep.subr.mxu0 0.0
  %221 = vmatpush2.msra.mxu0 0.0
  %222 = vmatprep.subr.mxu0 0.0
  %223 = vmatpush2.msra.mxu0 0.0
  %224 = vmatprep.mubr.f32.mxu0 0.0
  %225 = vmatmul.mubr.f32.gmra.mxu0 %v65
  %v226 = vpop.f32.mrf.mxu0
  %v227 = vadd.f32 %v61, %v226
  %v228 = vpop.f32.mrf.mxu0
  %229 = vmatprep.mubr.f32.mxu0 0.0
  %230 = vmatmul.mubr.f32.gmra.mxu0 %v68
  %v231 = vpop.f32.mrf.mxu0
  %v232 = vadd.f32 %v61, %v231
  %v233 = vpop.f32.mrf.mxu0
  %234 = vmatprep.mubr.f32.mxu0 0.0
  %235 = vmatmul.mubr.f32.gmra.mxu0 %v71
  %v236 = vpop.f32.mrf.mxu0
  %v237 = vadd.f32 %v61, %v236
  %v238 = vpop.f32.mrf.mxu0
  %239 = vmatprep.mubr.f32.mxu0 0.0
  %240 = vmatmul.mubr.f32.gmra.mxu0 %v74
  %v241 = vpop.f32.mrf.mxu0
  %v242 = vadd.f32 %v61, %v241
  %v243 = vpop.f32.mrf.mxu0
  %244 = vmatprep.mubr.f32.mxu0 0.0
  %245 = vmatmul.mubr.f32.gmra.mxu0 %v77
  %v246 = vpop.f32.mrf.mxu0
  %v247 = vadd.f32 %v61, %v246
  %v248 = vpop.f32.mrf.mxu0
  %249 = vmatprep.mubr.f32.mxu0 0.0
  %250 = vmatmul.mubr.f32.gmra.mxu0 %v80
  %v251 = vpop.f32.mrf.mxu0
  %v252 = vadd.f32 %v61, %v251
  %v253 = vpop.f32.mrf.mxu0
  %254 = vmatprep.mubr.f32.mxu0 0.0
  %255 = vmatmul.mubr.f32.gmra.mxu0 %v83
  %v256 = vpop.f32.mrf.mxu0
  %v257 = vadd.f32 %v61, %v256
  %v258 = vpop.f32.mrf.mxu0
  %259 = vmatprep.mubr.f32.mxu0 0.0
  %260 = vmatmul.mubr.f32.gmra.mxu0 %v86
  %v261 = vpop.f32.mrf.mxu0
  %v262 = vadd.f32 %v61, %v261
  %v263 = vpop.f32.mrf.mxu0
  %264 = vmatprep.mubr.f32.mxu0 0.0
  %265 = vmatmul.mubr.f32.gmra.mxu0 %v89
  %v266 = vpop.f32.mrf.mxu0
  %v267 = vadd.f32 %v61, %v266
  %v268 = vpop.f32.mrf.mxu0
  %269 = vmatprep.mubr.f32.mxu0 0.0
  %270 = vmatmul.mubr.f32.gmra.mxu0 %v92
  %v271 = vpop.f32.mrf.mxu0
  %v272 = vadd.f32 %v61, %v271
  %v273 = vpop.f32.mrf.mxu0
  %274 = vmatprep.mubr.f32.mxu0 0.0
  %275 = vmatmul.mubr.f32.gmra.mxu0 %v95
  %v276 = vpop.f32.mrf.mxu0
  %v277 = vadd.f32 %v61, %v276
  %v278 = vpop.f32.mrf.mxu0
  %279 = vmatprep.mubr.f32.mxu0 0.0
  %280 = vmatmul.mubr.f32.gmra.mxu0 %v98
  %v281 = vpop.f32.mrf.mxu0
  %v282 = vadd.f32 %v61, %v281
  %v283 = vpop.f32.mrf.mxu0
  %284 = vmatprep.mubr.f32.mxu0 0.0
  %285 = vmatmul.mubr.f32.gmra.mxu0 %v101
  %v286 = vpop.f32.mrf.mxu0
  %v287 = vadd.f32 %v61, %v286
  %v288 = vpop.f32.mrf.mxu0
  %289 = vmatprep.mubr.f32.mxu0 0.0
  %290 = vmatmul.mubr.f32.gmra.mxu0 %v104
  %v291 = vpop.f32.mrf.mxu0
  %v292 = vadd.f32 %v61, %v291
  %v293 = vpop.f32.mrf.mxu0
  %294 = vmatprep.mubr.f32.mxu0 0.0
  %295 = vmatmul.mubr.f32.gmra.mxu0 %v107
  %v296 = vpop.f32.mrf.mxu0
  %v297 = vadd.f32 %v61, %v296
  %v298 = vpop.f32.mrf.mxu0
  %299 = vmatprep.mubr.f32.mxu0 0.0
  %300 = vmatmul.mubr.f32.gmra.mxu0 %v110
  %v301 = vpop.f32.mrf.mxu0
  %v302 = vadd.f32 %v61, %v301
  %v303 = vpop.f32.mrf.mxu0
  %304 = vmatprep.mubr.f32.mxu0 0.0
  %305 = vmatmul.mubr.f32.gmra.mxu0 %v113
  %v306 = vpop.f32.mrf.mxu0
  %v307 = vadd.f32 %v61, %v306
  %v308 = vpop.f32.mrf.mxu0
  %309 = vmatprep.mubr.f32.mxu0 0.0
  %310 = vmatmul.mubr.f32.gmra.mxu0 %v116
  %v311 = vpop.f32.mrf.mxu0
  %v312 = vadd.f32 %v61, %v311
  %v313 = vpop.f32.mrf.mxu0
  %314 = vmatprep.mubr.f32.mxu0 0.0
  %315 = vmatmul.mubr.f32.gmra.mxu0 %v119
  %v316 = vpop.f32.mrf.mxu0
  %v317 = vadd.f32 %v61, %v316
  %v318 = vpop.f32.mrf.mxu0
  %319 = vmatprep.mubr.f32.mxu0 0.0
  %320 = vmatmul.mubr.f32.gmra.mxu0 %v122
  %v321 = vpop.f32.mrf.mxu0
  %v322 = vadd.f32 %v61, %v321
  %v323 = vpop.f32.mrf.mxu0
  %324 = vmatprep.mubr.f32.mxu0 0.0
  %325 = vmatmul.mubr.f32.gmra.mxu0 %v125
  %v326 = vpop.f32.mrf.mxu0
  %v327 = vadd.f32 %v61, %v326
  %v328 = vpop.f32.mrf.mxu0
  %329 = vmatprep.mubr.f32.mxu0 0.0
  %330 = vmatmul.mubr.f32.gmra.mxu0 %v128
  %v331 = vpop.f32.mrf.mxu0
  %v332 = vadd.f32 %v61, %v331
  %v333 = vpop.f32.mrf.mxu0
  %334 = vmatprep.mubr.f32.mxu0 0.0
  %335 = vmatmul.mubr.f32.gmra.mxu0 %v131
  %v336 = vpop.f32.mrf.mxu0
  %v337 = vadd.f32 %v61, %v336
  %v338 = vpop.f32.mrf.mxu0
  %339 = vmatprep.mubr.f32.mxu0 0.0
  %340 = vmatmul.mubr.f32.gmra.mxu0 %v134
  %v341 = vpop.f32.mrf.mxu0
  %v342 = vadd.f32 %v61, %v341
  %v343 = vpop.f32.mrf.mxu0
  %344 = vmatprep.mubr.f32.mxu0 0.0
  %345 = vmatmul.mubr.f32.gmra.mxu0 %v137
  %v346 = vpop.f32.mrf.mxu0
  %v347 = vadd.f32 %v61, %v346
  %v348 = vpop.f32.mrf.mxu0
  %349 = vmatprep.mubr.f32.mxu0 0.0
  %350 = vmatmul.mubr.f32.gmra.mxu0 %v140
  %v351 = vpop.f32.mrf.mxu0
  %v352 = vadd.f32 %v61, %v351
  %v353 = vpop.f32.mrf.mxu0
  %354 = vmatprep.mubr.f32.mxu0 0.0
  %355 = vmatmul.mubr.f32.gmra.mxu0 %v143
  %v356 = vpop.f32.mrf.mxu0
  %v357 = vadd.f32 %v61, %v356
  %v358 = vpop.f32.mrf.mxu0
  %359 = vmatprep.mubr.f32.mxu0 0.0
  %360 = vmatmul.mubr.f32.gmra.mxu0 %v146
  %v361 = vpop.f32.mrf.mxu0
  %v362 = vadd.f32 %v61, %v361
  %v363 = vpop.f32.mrf.mxu0
  %364 = vmatprep.mubr.f32.mxu0 0.0
  %365 = vmatmul.mubr.f32.gmra.mxu0 %v149
  %v366 = vpop.f32.mrf.mxu0
  %v367 = vadd.f32 %v61, %v366
  %v368 = vpop.f32.mrf.mxu0
  %369 = vmatprep.mubr.f32.mxu0 0.0
  %370 = vmatmul.mubr.f32.gmra.mxu0 %v152
  %v371 = vpop.f32.mrf.mxu0
  %v372 = vadd.f32 %v61, %v371
  %v373 = vpop.f32.mrf.mxu0
  %374 = vmatprep.mubr.f32.mxu0 0.0
  %375 = vmatmul.mubr.f32.gmra.mxu0 %v155
  %v376 = vpop.f32.mrf.mxu0
  %v377 = vadd.f32 %v61, %v376
  %v378 = vpop.f32.mrf.mxu0
  %379 = vmatprep.mubr.f32.mxu0 0.0
  %380 = vmatmul.mubr.f32.gmra.mxu0 %v158
  %v381 = vpop.f32.mrf.mxu0
  %v382 = vadd.f32 %v61, %v381
  %v383 = vpop.f32.mrf.mxu0
  %384 = vdwg.mxu0
  %v385 = vmul.f32 %v227, 0.5
  %v386 = vmul.f32 %v232, 0.5
  %v387 = vmul.f32 %v237, 0.5
  %v388 = vmul.f32 %v242, 0.5
  %v389 = vmul.f32 %v247, 0.5
  %v390 = vmul.f32 %v252, 0.5
  %v391 = vmul.f32 %v257, 0.5
  %v392 = vmul.f32 %v262, 0.5
  %v393 = vmul.f32 %v267, 0.5
  %v394 = vmul.f32 %v272, 0.5
  %v395 = vmul.f32 %v277, 0.5
  %v396 = vmul.f32 %v282, 0.5
  %v397 = vmul.f32 %v287, 0.5
  %v398 = vmul.f32 %v292, 0.5
  %v399 = vmul.f32 %v297, 0.5
  %v400 = vmul.f32 %v302, 0.5
  %v401 = vmul.f32 %v307, 0.5
  %v402 = vmul.f32 %v312, 0.5
  %v403 = vmul.f32 %v317, 0.5
  %v404 = vmul.f32 %v322, 0.5
  %v405 = vmul.f32 %v327, 0.5
  %v406 = vmul.f32 %v332, 0.5
  %v407 = vmul.f32 %v337, 0.5
  %v408 = vmul.f32 %v342, 0.5
  %v409 = vmul.f32 %v347, 0.5
  %v410 = vmul.f32 %v352, 0.5
  %v411 = vmul.f32 %v357, 0.5
  %v412 = vmul.f32 %v362, 0.5
  %v413 = vmul.f32 %v367, 0.5
  %v414 = vmul.f32 %v372, 0.5
  %v415 = vmul.f32 %v377, 0.5
  %v416 = vmul.f32 %v382, 0.5
  %v417 = vmul.f32 %v227, 0.70710677
  %v418 = vmul.f32 %v232, 0.70710677
  %v419 = vmul.f32 %v237, 0.70710677
  %v420 = vmul.f32 %v242, 0.70710677
  %v421 = vmul.f32 %v247, 0.70710677
  %v422 = vmul.f32 %v252, 0.70710677
  %v423 = vmul.f32 %v257, 0.70710677
  %v424 = vmul.f32 %v262, 0.70710677
  %v425 = vmul.f32 %v267, 0.70710677
  %v426 = vmul.f32 %v272, 0.70710677
  %v427 = vmul.f32 %v277, 0.70710677
  %v428 = vmul.f32 %v282, 0.70710677
  %v429 = vmul.f32 %v287, 0.70710677
  %v430 = vmul.f32 %v292, 0.70710677
  %v431 = vmul.f32 %v297, 0.70710677
  %v432 = vmul.f32 %v302, 0.70710677
  %v433 = vmul.f32 %v307, 0.70710677
  %v434 = vmul.f32 %v312, 0.70710677
  %v435 = vmul.f32 %v317, 0.70710677
  %v436 = vmul.f32 %v322, 0.70710677
  %v437 = vmul.f32 %v327, 0.70710677
  %v438 = vmul.f32 %v332, 0.70710677
  %v439 = vmul.f32 %v337, 0.70710677
  %v440 = vmul.f32 %v342, 0.70710677
  %v441 = vmul.f32 %v347, 0.70710677
  %v442 = vmul.f32 %v352, 0.70710677
  %v443 = vmul.f32 %v357, 0.70710677
  %v444 = vmul.f32 %v362, 0.70710677
  %v445 = vmul.f32 %v367, 0.70710677
  %v446 = vmul.f32 %v372, 0.70710677
  %v447 = vmul.f32 %v377, 0.70710677
  %v448 = vmul.f32 %v382, 0.70710677
  %v449 = verf.f32.pop %v417
  %v450 = verf.f32.pop %v418
  %v451 = verf.f32.pop %v419
  %v452 = verf.f32.pop %v420
  %v453 = verf.f32.pop %v421
  %v454 = verf.f32.pop %v422
  %v455 = verf.f32.pop %v423
  %v456 = verf.f32.pop %v424
  %v457 = verf.f32.pop %v425
  %v458 = verf.f32.pop %v426
  %v459 = verf.f32.pop %v427
  %v460 = verf.f32.pop %v428
  %v461 = verf.f32.pop %v429
  %v462 = verf.f32.pop %v430
  %v463 = verf.f32.pop %v431
  %v464 = verf.f32.pop %v432
  %v465 = verf.f32.pop %v433
  %v466 = verf.f32.pop %v434
  %v467 = verf.f32.pop %v435
  %v468 = verf.f32.pop %v436
  %v469 = verf.f32.pop %v437
  %v470 = verf.f32.pop %v438
  %v471 = verf.f32.pop %v439
  %v472 = verf.f32.pop %v440
  %v473 = verf.f32.pop %v441
  %v474 = verf.f32.pop %v442
  %v475 = verf.f32.pop %v443
  %v476 = verf.f32.pop %v444
  %v477 = verf.f32.pop %v445
  %v478 = verf.f32.pop %v446
  %v479 = verf.f32.pop %v447
  %v480 = verf.f32.pop %v448
  %v481 = vadd.f32 %v449, 1.0
  %v482 = vadd.f32 %v450, 1.0
  %v483 = vadd.f32 %v451, 1.0
  %v484 = vadd.f32 %v452, 1.0
  %v485 = vadd.f32 %v453, 1.0
  %v486 = vadd.f32 %v454, 1.0
  %v487 = vadd.f32 %v455, 1.0
  %v488 = vadd.f32 %v456, 1.0
  %v489 = vadd.f32 %v457, 1.0
  %v490 = vadd.f32 %v458, 1.0
  %v491 = vadd.f32 %v459, 1.0
  %v492 = vadd.f32 %v460, 1.0
  %v493 = vadd.f32 %v461, 1.0
  %v494 = vadd.f32 %v462, 1.0
  %v495 = vadd.f32 %v463, 1.0
  %v496 = vadd.f32 %v464, 1.0
  %v497 = vadd.f32 %v465, 1.0
  %v498 = vadd.f32 %v466, 1.0
  %v499 = vadd.f32 %v467, 1.0
  %v500 = vadd.f32 %v468, 1.0
  %v501 = vadd.f32 %v469, 1.0
  %v502 = vadd.f32 %v470, 1.0
  %v503 = vadd.f32 %v471, 1.0
  %v504 = vadd.f32 %v472, 1.0
  %v505 = vadd.f32 %v473, 1.0
  %v506 = vadd.f32 %v474, 1.0
  %v507 = vadd.f32 %v475, 1.0
  %v508 = vadd.f32 %v476, 1.0
  %v509 = vadd.f32 %v477, 1.0
  %v510 = vadd.f32 %v478, 1.0
  %v511 = vadd.f32 %v479, 1.0
  %v512 = vadd.f32 %v480, 1.0
  %v513 = vmul.f32 %v385, %v481
  %v514 = vmul.f32 %v386, %v482
  %v515 = vmul.f32 %v387, %v483
  %v516 = vmul.f32 %v388, %v484
  %v517 = vmul.f32 %v389, %v485
  %v518 = vmul.f32 %v390, %v486
  %v519 = vmul.f32 %v391, %v487
  %v520 = vmul.f32 %v392, %v488
  %v521 = vmul.f32 %v393, %v489
  %v522 = vmul.f32 %v394, %v490
  %v523 = vmul.f32 %v395, %v491
  %v524 = vmul.f32 %v396, %v492
  %v525 = vmul.f32 %v397, %v493
  %v526 = vmul.f32 %v398, %v494
  %v527 = vmul.f32 %v399, %v495
  %v528 = vmul.f32 %v400, %v496
  %v529 = vmul.f32 %v401, %v497
  %v530 = vmul.f32 %v402, %v498
  %v531 = vmul.f32 %v403, %v499
  %v532 = vmul.f32 %v404, %v500
  %v533 = vmul.f32 %v405, %v501
  %v534 = vmul.f32 %v406, %v502
  %v535 = vmul.f32 %v407, %v503
  %v536 = vmul.f32 %v408, %v504
  %v537 = vmul.f32 %v409, %v505
  %v538 = vmul.f32 %v410, %v506
  %v539 = vmul.f32 %v411, %v507
  %v540 = vmul.f32 %v412, %v508
  %v541 = vmul.f32 %v413, %v509
  %v542 = vmul.f32 %v414, %v510
  %v543 = vmul.f32 %v415, %v511
  %v544 = vmul.f32 %v416, %v512
  %v545 = vsel %vm63, %v513, 0.0
  %546 = vadd.xlane.f32.xlu0 %v545
  %v547 = vpop.xlane.xlu0 %546
  %v548 = vsel %vm63, %v514, 0.0
  %549 = vadd.xlane.f32.xlu0 %v548
  %v550 = vpop.xlane.xlu0 %549
  %v551 = vsel %vm63, %v515, 0.0
  %552 = vadd.xlane.f32.xlu0 %v551
  %v553 = vpop.xlane.xlu0 %552
  %v554 = vsel %vm63, %v516, 0.0
  %555 = vadd.xlane.f32.xlu0 %v554
  %v556 = vpop.xlane.xlu0 %555
  %v557 = vsel %vm63, %v517, 0.0
  %558 = vadd.xlane.f32.xlu0 %v557
  %v559 = vpop.xlane.xlu0 %558
  %v560 = vsel %vm63, %v518, 0.0
  %561 = vadd.xlane.f32.xlu0 %v560
  %v562 = vpop.xlane.xlu0 %561
  %v563 = vsel %vm63, %v519, 0.0
  %564 = vadd.xlane.f32.xlu0 %v563
  %v565 = vpop.xlane.xlu0 %564
  %v566 = vsel %vm63, %v520, 0.0
  %567 = vadd.xlane.f32.xlu0 %v566
  %v568 = vpop.xlane.xlu0 %567
  %v569 = vsel %vm63, %v521, 0.0
  %570 = vadd.xlane.f32.xlu0 %v569
  %v571 = vpop.xlane.xlu0 %570
  %v572 = vsel %vm63, %v522, 0.0
  %573 = vadd.xlane.f32.xlu0 %v572
  %v574 = vpop.xlane.xlu0 %573
  %v575 = vsel %vm63, %v523, 0.0
  %576 = vadd.xlane.f32.xlu0 %v575
  %v577 = vpop.xlane.xlu0 %576
  %v578 = vsel %vm63, %v524, 0.0
  %579 = vadd.xlane.f32.xlu0 %v578
  %v580 = vpop.xlane.xlu0 %579
  %v581 = vsel %vm63, %v525, 0.0
  %582 = vadd.xlane.f32.xlu0 %v581
  %v583 = vpop.xlane.xlu0 %582
  %v584 = vsel %vm63, %v526, 0.0
  %585 = vadd.xlane.f32.xlu0 %v584
  %v586 = vpop.xlane.xlu0 %585
  %v587 = vsel %vm63, %v527, 0.0
  %588 = vadd.xlane.f32.xlu0 %v587
  %v589 = vpop.xlane.xlu0 %588
  %v590 = vsel %vm63, %v528, 0.0
  %591 = vadd.xlane.f32.xlu0 %v590
  %v592 = vpop.xlane.xlu0 %591
  %v593 = vsel %vm63, %v529, 0.0
  %594 = vadd.xlane.f32.xlu0 %v593
  %v595 = vpop.xlane.xlu0 %594
  %v596 = vsel %vm63, %v530, 0.0
  %597 = vadd.xlane.f32.xlu0 %v596
  %v598 = vpop.xlane.xlu0 %597
  %v599 = vsel %vm63, %v531, 0.0
  %600 = vadd.xlane.f32.xlu0 %v599
  %v601 = vpop.xlane.xlu0 %600
  %v602 = vsel %vm63, %v532, 0.0
  %603 = vadd.xlane.f32.xlu0 %v602
  %v604 = vpop.xlane.xlu0 %603
  %v605 = vsel %vm63, %v533, 0.0
  %606 = vadd.xlane.f32.xlu0 %v605
  %v607 = vpop.xlane.xlu0 %606
  %v608 = vsel %vm63, %v534, 0.0
  %609 = vadd.xlane.f32.xlu0 %v608
  %v610 = vpop.xlane.xlu0 %609
  %v611 = vsel %vm63, %v535, 0.0
  %612 = vadd.xlane.f32.xlu0 %v611
  %v613 = vpop.xlane.xlu0 %612
  %v614 = vsel %vm63, %v536, 0.0
  %615 = vadd.xlane.f32.xlu0 %v614
  %v616 = vpop.xlane.xlu0 %615
  %v617 = vsel %vm63, %v537, 0.0
  %618 = vadd.xlane.f32.xlu0 %v617
  %v619 = vpop.xlane.xlu0 %618
  %v620 = vsel %vm63, %v538, 0.0
  %621 = vadd.xlane.f32.xlu0 %v620
  %v622 = vpop.xlane.xlu0 %621
  %v623 = vsel %vm63, %v539, 0.0
  %624 = vadd.xlane.f32.xlu0 %v623
  %v625 = vpop.xlane.xlu0 %624
  %v626 = vsel %vm63, %v540, 0.0
  %627 = vadd.xlane.f32.xlu0 %v626
  %v628 = vpop.xlane.xlu0 %627
  %v629 = vsel %vm63, %v541, 0.0
  %630 = vadd.xlane.f32.xlu0 %v629
  %v631 = vpop.xlane.xlu0 %630
  %v632 = vsel %vm63, %v542, 0.0
  %633 = vadd.xlane.f32.xlu0 %v632
  %v634 = vpop.xlane.xlu0 %633
  %v635 = vsel %vm63, %v543, 0.0
  %636 = vadd.xlane.f32.xlu0 %v635
  %v637 = vpop.xlane.xlu0 %636
  %v638 = vsel %vm63, %v544, 0.0
  %639 = vadd.xlane.f32.xlu0 %v638
  %v640 = vpop.xlane.xlu0 %639
  %v641 = vrcp.pop 32.0
  %v642 = vmul.f32 %v547, %v641
  %v643 = vmul.f32 %v550, %v641
  %v644 = vmul.f32 %v553, %v641
  %v645 = vmul.f32 %v556, %v641
  %v646 = vmul.f32 %v559, %v641
  %v647 = vmul.f32 %v562, %v641
  %v648 = vmul.f32 %v565, %v641
  %v649 = vmul.f32 %v568, %v641
  %v650 = vmul.f32 %v571, %v641
  %v651 = vmul.f32 %v574, %v641
  %v652 = vmul.f32 %v577, %v641
  %v653 = vmul.f32 %v580, %v641
  %v654 = vmul.f32 %v583, %v641
  %v655 = vmul.f32 %v586, %v641
  %v656 = vmul.f32 %v589, %v641
  %v657 = vmul.f32 %v592, %v641
  %v658 = vmul.f32 %v595, %v641
  %v659 = vmul.f32 %v598, %v641
  %v660 = vmul.f32 %v601, %v641
  %v661 = vmul.f32 %v604, %v641
  %v662 = vmul.f32 %v607, %v641
  %v663 = vmul.f32 %v610, %v641
  %v664 = vmul.f32 %v613, %v641
  %v665 = vmul.f32 %v616, %v641
  %v666 = vmul.f32 %v619, %v641
  %v667 = vmul.f32 %v622, %v641
  %v668 = vmul.f32 %v625, %v641
  %v669 = vmul.f32 %v628, %v641
  %v670 = vmul.f32 %v631, %v641
  %v671 = vmul.f32 %v634, %v641
  %v672 = vmul.f32 %v637, %v641
  %v673 = vmul.f32 %v640, %v641
  %v674 = vsub.f32 %v513, %v642
  %v675 = vsub.f32 %v514, %v643
  %v676 = vsub.f32 %v515, %v644
  %v677 = vsub.f32 %v516, %v645
  %v678 = vsub.f32 %v517, %v646
  %v679 = vsub.f32 %v518, %v647
  %v680 = vsub.f32 %v519, %v648
  %v681 = vsub.f32 %v520, %v649
  %v682 = vsub.f32 %v521, %v650
  %v683 = vsub.f32 %v522, %v651
  %v684 = vsub.f32 %v523, %v652
  %v685 = vsub.f32 %v524, %v653
  %v686 = vsub.f32 %v525, %v654
  %v687 = vsub.f32 %v526, %v655
  %v688 = vsub.f32 %v527, %v656
  %v689 = vsub.f32 %v528, %v657
  %v690 = vsub.f32 %v529, %v658
  %v691 = vsub.f32 %v530, %v659
  %v692 = vsub.f32 %v531, %v660
  %v693 = vsub.f32 %v532, %v661
  %v694 = vsub.f32 %v533, %v662
  %v695 = vsub.f32 %v534, %v663
  %v696 = vsub.f32 %v535, %v664
  %v697 = vsub.f32 %v536, %v665
  %v698 = vsub.f32 %v537, %v666
  %v699 = vsub.f32 %v538, %v667
  %v700 = vsub.f32 %v539, %v668
  %v701 = vsub.f32 %v540, %v669
  %v702 = vsub.f32 %v541, %v670
  %v703 = vsub.f32 %v542, %v671
  %v704 = vsub.f32 %v543, %v672
  %v705 = vsub.f32 %v544, %v673
  %v706 = vmul.f32 %v674, %v674
  %v707 = vmul.f32 %v675, %v675
  %v708 = vmul.f32 %v676, %v676
  %v709 = vmul.f32 %v677, %v677
  %v710 = vmul.f32 %v678, %v678
  %v711 = vmul.f32 %v679, %v679
  %v712 = vmul.f32 %v680, %v680
  %v713 = vmul.f32 %v681, %v681
  %v714 = vmul.f32 %v682, %v682
  %v715 = vmul.f32 %v683, %v683
  %v716 = vmul.f32 %v684, %v684
  %v717 = vmul.f32 %v685, %v685
  %v718 = vmul.f32 %v686, %v686
  %v719 = vmul.f32 %v687, %v687
  %v720 = vmul.f32 %v688, %v688
  %v721 = vmul.f32 %v689, %v689
  %v722 = vmul.f32 %v690, %v690
  %v723 = vmul.f32 %v691, %v691
  %v724 = vmul.f32 %v692, %v692
  %v725 = vmul.f32 %v693, %v693
  %v726 = vmul.f32 %v694, %v694
  %v727 = vmul.f32 %v695, %v695
  %v728 = vmul.f32 %v696, %v696
  %v729 = vmul.f32 %v697, %v697
  %v730 = vmul.f32 %v698, %v698
  %v731 = vmul.f32 %v699, %v699
  %v732 = vmul.f32 %v700, %v700
  %v733 = vmul.f32 %v701, %v701
  %v734 = vmul.f32 %v702, %v702
  %v735 = vmul.f32 %v703, %v703
  %v736 = vmul.f32 %v704, %v704
  %v737 = vmul.f32 %v705, %v705
  %v738 = vsel %vm63, %v706, 0.0
  %739 = vadd.xlane.f32.xlu0 %v738
  %v740 = vpop.xlane.xlu0 %739
  %v741 = vsel %vm63, %v707, 0.0
  %742 = vadd.xlane.f32.xlu0 %v741
  %v743 = vpop.xlane.xlu0 %742
  %v744 = vsel %vm63, %v708, 0.0
  %745 = vadd.xlane.f32.xlu0 %v744
  %v746 = vpop.xlane.xlu0 %745
  %v747 = vsel %vm63, %v709, 0.0
  %748 = vadd.xlane.f32.xlu0 %v747
  %v749 = vpop.xlane.xlu0 %748
  %v750 = vsel %vm63, %v710, 0.0
  %751 = vadd.xlane.f32.xlu0 %v750
  %v752 = vpop.xlane.xlu0 %751
  %v753 = vsel %vm63, %v711, 0.0
  %754 = vadd.xlane.f32.xlu0 %v753
  %v755 = vpop.xlane.xlu0 %754
  %v756 = vsel %vm63, %v712, 0.0
  %757 = vadd.xlane.f32.xlu0 %v756
  %v758 = vpop.xlane.xlu0 %757
  %v759 = vsel %vm63, %v713, 0.0
  %760 = vadd.xlane.f32.xlu0 %v759
  %v761 = vpop.xlane.xlu0 %760
  %v762 = vsel %vm63, %v714, 0.0
  %763 = vadd.xlane.f32.xlu0 %v762
  %v764 = vpop.xlane.xlu0 %763
  %v765 = vsel %vm63, %v715, 0.0
  %766 = vadd.xlane.f32.xlu0 %v765
  %v767 = vpop.xlane.xlu0 %766
  %v768 = vsel %vm63, %v716, 0.0
  %769 = vadd.xlane.f32.xlu0 %v768
  %v770 = vpop.xlane.xlu0 %769
  %v771 = vsel %vm63, %v717, 0.0
  %772 = vadd.xlane.f32.xlu0 %v771
  %v773 = vpop.xlane.xlu0 %772
  %v774 = vsel %vm63, %v718, 0.0
  %775 = vadd.xlane.f32.xlu0 %v774
  %v776 = vpop.xlane.xlu0 %775
  %v777 = vsel %vm63, %v719, 0.0
  %778 = vadd.xlane.f32.xlu0 %v777
  %v779 = vpop.xlane.xlu0 %778
  %v780 = vsel %vm63, %v720, 0.0
  %781 = vadd.xlane.f32.xlu0 %v780
  %v782 = vpop.xlane.xlu0 %781
  %v783 = vsel %vm63, %v721, 0.0
  %784 = vadd.xlane.f32.xlu0 %v783
  %v785 = vpop.xlane.xlu0 %784
  %v786 = vsel %vm63, %v722, 0.0
  %787 = vadd.xlane.f32.xlu0 %v786
  %v788 = vpop.xlane.xlu0 %787
  %v789 = vsel %vm63, %v723, 0.0
  %790 = vadd.xlane.f32.xlu0 %v789
  %v791 = vpop.xlane.xlu0 %790
  %v792 = vsel %vm63, %v724, 0.0
  %793 = vadd.xlane.f32.xlu0 %v792
  %v794 = vpop.xlane.xlu0 %793
  %v795 = vsel %vm63, %v725, 0.0
  %796 = vadd.xlane.f32.xlu0 %v795
  %v797 = vpop.xlane.xlu0 %796
  %v798 = vsel %vm63, %v726, 0.0
  %799 = vadd.xlane.f32.xlu0 %v798
  %v800 = vpop.xlane.xlu0 %799
  %v801 = vsel %vm63, %v727, 0.0
  %802 = vadd.xlane.f32.xlu0 %v801
  %v803 = vpop.xlane.xlu0 %802
  %v804 = vsel %vm63, %v728, 0.0
  %805 = vadd.xlane.f32.xlu0 %v804
  %v806 = vpop.xlane.xlu0 %805
  %v807 = vsel %vm63, %v729, 0.0
  %808 = vadd.xlane.f32.xlu0 %v807
  %v809 = vpop.xlane.xlu0 %808
  %v810 = vsel %vm63, %v730, 0.0
  %811 = vadd.xlane.f32.xlu0 %v810
  %v812 = vpop.xlane.xlu0 %811
  %v813 = vsel %vm63, %v731, 0.0
  %814 = vadd.xlane.f32.xlu0 %v813
  %v815 = vpop.xlane.xlu0 %814
  %v816 = vsel %vm63, %v732, 0.0
  %817 = vadd.xlane.f32.xlu0 %v816
  %v818 = vpop.xlane.xlu0 %817
  %v819 = vsel %vm63, %v733, 0.0
  %820 = vadd.xlane.f32.xlu0 %v819
  %v821 = vpop.xlane.xlu0 %820
  %v822 = vsel %vm63, %v734, 0.0
  %823 = vadd.xlane.f32.xlu0 %v822
  %v824 = vpop.xlane.xlu0 %823
  %v825 = vsel %vm63, %v735, 0.0
  %826 = vadd.xlane.f32.xlu0 %v825
  %v827 = vpop.xlane.xlu0 %826
  %v828 = vsel %vm63, %v736, 0.0
  %829 = vadd.xlane.f32.xlu0 %v828
  %v830 = vpop.xlane.xlu0 %829
  %v831 = vsel %vm63, %v737, 0.0
  %832 = vadd.xlane.f32.xlu0 %v831
  %v833 = vpop.xlane.xlu0 %832
  %v834 = vmul.f32 %v740, %v641
  %v835 = vmul.f32 %v743, %v641
  %v836 = vmul.f32 %v746, %v641
  %v837 = vmul.f32 %v749, %v641
  %v838 = vmul.f32 %v752, %v641
  %v839 = vmul.f32 %v755, %v641
  %v840 = vmul.f32 %v758, %v641
  %v841 = vmul.f32 %v761, %v641
  %v842 = vmul.f32 %v764, %v641
  %v843 = vmul.f32 %v767, %v641
  %v844 = vmul.f32 %v770, %v641
  %v845 = vmul.f32 %v773, %v641
  %v846 = vmul.f32 %v776, %v641
  %v847 = vmul.f32 %v779, %v641
  %v848 = vmul.f32 %v782, %v641
  %v849 = vmul.f32 %v785, %v641
  %v850 = vmul.f32 %v788, %v641
  %v851 = vmul.f32 %v791, %v641
  %v852 = vmul.f32 %v794, %v641
  %v853 = vmul.f32 %v797, %v641
  %v854 = vmul.f32 %v800, %v641
  %v855 = vmul.f32 %v803, %v641
  %v856 = vmul.f32 %v806, %v641
  %v857 = vmul.f32 %v809, %v641
  %v858 = vmul.f32 %v812, %v641
  %v859 = vmul.f32 %v815, %v641
  %v860 = vmul.f32 %v818, %v641
  %v861 = vmul.f32 %v821, %v641
  %v862 = vmul.f32 %v824, %v641
  %v863 = vmul.f32 %v827, %v641
  %v864 = vmul.f32 %v830, %v641
  %v865 = vmul.f32 %v833, %v641
  %v866 = vadd.f32 %v834, 1e-12
  %v867 = vadd.f32 %v835, 1e-12
  %v868 = vadd.f32 %v836, 1e-12
  %v869 = vadd.f32 %v837, 1e-12
  %v870 = vadd.f32 %v838, 1e-12
  %v871 = vadd.f32 %v839, 1e-12
  %v872 = vadd.f32 %v840, 1e-12
  %v873 = vadd.f32 %v841, 1e-12
  %v874 = vadd.f32 %v842, 1e-12
  %v875 = vadd.f32 %v843, 1e-12
  %v876 = vadd.f32 %v844, 1e-12
  %v877 = vadd.f32 %v845, 1e-12
  %v878 = vadd.f32 %v846, 1e-12
  %v879 = vadd.f32 %v847, 1e-12
  %v880 = vadd.f32 %v848, 1e-12
  %v881 = vadd.f32 %v849, 1e-12
  %v882 = vadd.f32 %v850, 1e-12
  %v883 = vadd.f32 %v851, 1e-12
  %v884 = vadd.f32 %v852, 1e-12
  %v885 = vadd.f32 %v853, 1e-12
  %v886 = vadd.f32 %v854, 1e-12
  %v887 = vadd.f32 %v855, 1e-12
  %v888 = vadd.f32 %v856, 1e-12
  %v889 = vadd.f32 %v857, 1e-12
  %v890 = vadd.f32 %v858, 1e-12
  %v891 = vadd.f32 %v859, 1e-12
  %v892 = vadd.f32 %v860, 1e-12
  %v893 = vadd.f32 %v861, 1e-12
  %v894 = vadd.f32 %v862, 1e-12
  %v895 = vadd.f32 %v863, 1e-12
  %v896 = vadd.f32 %v864, 1e-12
  %v897 = vadd.f32 %v865, 1e-12
  %v898 = vrsqrt.pop %v866
  %v899 = vrsqrt.pop %v867
  %v900 = vrsqrt.pop %v868
  %v901 = vrsqrt.pop %v869
  %v902 = vrsqrt.pop %v870
  %v903 = vrsqrt.pop %v871
  %v904 = vrsqrt.pop %v872
  %v905 = vrsqrt.pop %v873
  %v906 = vrsqrt.pop %v874
  %v907 = vrsqrt.pop %v875
  %v908 = vrsqrt.pop %v876
  %v909 = vrsqrt.pop %v877
  %v910 = vrsqrt.pop %v878
  %v911 = vrsqrt.pop %v879
  %v912 = vrsqrt.pop %v880
  %v913 = vrsqrt.pop %v881
  %v914 = vrsqrt.pop %v882
  %v915 = vrsqrt.pop %v883
  %v916 = vrsqrt.pop %v884
  %v917 = vrsqrt.pop %v885
  %v918 = vrsqrt.pop %v886
  %v919 = vrsqrt.pop %v887
  %v920 = vrsqrt.pop %v888
  %v921 = vrsqrt.pop %v889
  %v922 = vrsqrt.pop %v890
  %v923 = vrsqrt.pop %v891
  %v924 = vrsqrt.pop %v892
  %v925 = vrsqrt.pop %v893
  %v926 = vrsqrt.pop %v894
  %v927 = vrsqrt.pop %v895
  %v928 = vrsqrt.pop %v896
  %v929 = vrsqrt.pop %v897
  %v930 = vmul.f32 %v674, %v898
  %v931 = vmul.f32 %v675, %v899
  %v932 = vmul.f32 %v676, %v900
  %v933 = vmul.f32 %v677, %v901
  %v934 = vmul.f32 %v678, %v902
  %v935 = vmul.f32 %v679, %v903
  %v936 = vmul.f32 %v680, %v904
  %v937 = vmul.f32 %v681, %v905
  %v938 = vmul.f32 %v682, %v906
  %v939 = vmul.f32 %v683, %v907
  %v940 = vmul.f32 %v684, %v908
  %v941 = vmul.f32 %v685, %v909
  %v942 = vmul.f32 %v686, %v910
  %v943 = vmul.f32 %v687, %v911
  %v944 = vmul.f32 %v688, %v912
  %v945 = vmul.f32 %v689, %v913
  %v946 = vmul.f32 %v690, %v914
  %v947 = vmul.f32 %v691, %v915
  %v948 = vmul.f32 %v692, %v916
  %v949 = vmul.f32 %v693, %v917
  %v950 = vmul.f32 %v694, %v918
  %v951 = vmul.f32 %v695, %v919
  %v952 = vmul.f32 %v696, %v920
  %v953 = vmul.f32 %v697, %v921
  %v954 = vmul.f32 %v698, %v922
  %v955 = vmul.f32 %v699, %v923
  %v956 = vmul.f32 %v700, %v924
  %v957 = vmul.f32 %v701, %v925
  %v958 = vmul.f32 %v702, %v926
  %v959 = vmul.f32 %v703, %v927
  %v960 = vmul.f32 %v704, %v928
  %v961 = vmul.f32 %v705, %v929
  %v962 = vld [vmem:[%s3] sm:$0x1]
  %v964 = vlaneseq
  %v965 = vshrl.u32 %v964, 7
  %v966 = vsub.s32 0, %v965
  %v967 = vrot.slane %v962, %v966
  %v969 = vmul.f32 %v930, %v967
  %v970 = vmul.f32 %v931, %v967
  %v971 = vmul.f32 %v932, %v967
  %v972 = vmul.f32 %v933, %v967
  %v973 = vmul.f32 %v934, %v967
  %v974 = vmul.f32 %v935, %v967
  %v975 = vmul.f32 %v936, %v967
  %v976 = vmul.f32 %v937, %v967
  %v977 = vmul.f32 %v938, %v967
  %v978 = vmul.f32 %v939, %v967
  %v979 = vmul.f32 %v940, %v967
  %v980 = vmul.f32 %v941, %v967
  %v981 = vmul.f32 %v942, %v967
  %v982 = vmul.f32 %v943, %v967
  %v983 = vmul.f32 %v944, %v967
  %v984 = vmul.f32 %v945, %v967
  %v985 = vmul.f32 %v946, %v967
  %v986 = vmul.f32 %v947, %v967
  %v987 = vmul.f32 %v948, %v967
  %v988 = vmul.f32 %v949, %v967
  %v989 = vmul.f32 %v950, %v967
  %v990 = vmul.f32 %v951, %v967
  %v991 = vmul.f32 %v952, %v967
  %v992 = vmul.f32 %v953, %v967
  %v993 = vmul.f32 %v954, %v967
  %v994 = vmul.f32 %v955, %v967
  %v995 = vmul.f32 %v956, %v967
  %v996 = vmul.f32 %v957, %v967
  %v997 = vmul.f32 %v958, %v967
  %v998 = vmul.f32 %v959, %v967
  %v999 = vmul.f32 %v960, %v967
  %v1000 = vmul.f32 %v961, %v967
  %v1001 = vld [vmem:[%s4] sm:$0x1]
  %v1003 = vlaneseq
  %v1004 = vshrl.u32 %v1003, 7
  %v1005 = vsub.s32 0, %v1004
  %v1006 = vrot.slane %v1001, %v1005
  %v1008 = vadd.f32 %v969, %v1006
  %v1009 = vadd.f32 %v970, %v1006
  %v1010 = vadd.f32 %v971, %v1006
  %v1011 = vadd.f32 %v972, %v1006
  %v1012 = vadd.f32 %v973, %v1006
  %v1013 = vadd.f32 %v974, %v1006
  %v1014 = vadd.f32 %v975, %v1006
  %v1015 = vadd.f32 %v976, %v1006
  %v1016 = vadd.f32 %v977, %v1006
  %v1017 = vadd.f32 %v978, %v1006
  %v1018 = vadd.f32 %v979, %v1006
  %v1019 = vadd.f32 %v980, %v1006
  %v1020 = vadd.f32 %v981, %v1006
  %v1021 = vadd.f32 %v982, %v1006
  %v1022 = vadd.f32 %v983, %v1006
  %v1023 = vadd.f32 %v984, %v1006
  %v1024 = vadd.f32 %v985, %v1006
  %v1025 = vadd.f32 %v986, %v1006
  %v1026 = vadd.f32 %v987, %v1006
  %v1027 = vadd.f32 %v988, %v1006
  %v1028 = vadd.f32 %v989, %v1006
  %v1029 = vadd.f32 %v990, %v1006
  %v1030 = vadd.f32 %v991, %v1006
  %v1031 = vadd.f32 %v992, %v1006
  %v1032 = vadd.f32 %v993, %v1006
  %v1033 = vadd.f32 %v994, %v1006
  %v1034 = vadd.f32 %v995, %v1006
  %v1035 = vadd.f32 %v996, %v1006
  %v1036 = vadd.f32 %v997, %v1006
  %v1037 = vadd.f32 %v998, %v1006
  %v1038 = vadd.f32 %v999, %v1006
  %v1039 = vadd.f32 %v1000, %v1006
  %1040 = vst.msk [vmem:[%s5] sm:$0xff] %vm63, %v1008
  %1041 = vst.msk [vmem:[%s5 + $0x8] sm:$0xff] %vm63, %v1009
  %1042 = vst.msk [vmem:[%s5 + $0x10] sm:$0xff] %vm63, %v1010
  %1043 = vst.msk [vmem:[%s5 + $0x18] sm:$0xff] %vm63, %v1011
  %1044 = vst.msk [vmem:[%s5 + $0x20] sm:$0xff] %vm63, %v1012
  %1045 = vst.msk [vmem:[%s5 + $0x28] sm:$0xff] %vm63, %v1013
  %1046 = vst.msk [vmem:[%s5 + $0x30] sm:$0xff] %vm63, %v1014
  %1047 = vst.msk [vmem:[%s5 + $0x38] sm:$0xff] %vm63, %v1015
  %1048 = vst.msk [vmem:[%s5 + $0x40] sm:$0xff] %vm63, %v1016
  %1049 = vst.msk [vmem:[%s5 + $0x48] sm:$0xff] %vm63, %v1017
  %1050 = vst.msk [vmem:[%s5 + $0x50] sm:$0xff] %vm63, %v1018
  %1051 = vst.msk [vmem:[%s5 + $0x58] sm:$0xff] %vm63, %v1019
  %1052 = vst.msk [vmem:[%s5 + $0x60] sm:$0xff] %vm63, %v1020
  %1053 = vst.msk [vmem:[%s5 + $0x68] sm:$0xff] %vm63, %v1021
  %1054 = vst.msk [vmem:[%s5 + $0x70] sm:$0xff] %vm63, %v1022
  %1055 = vst.msk [vmem:[%s5 + $0x78] sm:$0xff] %vm63, %v1023
  %1056 = vst.msk [vmem:[%s5 + $0x80] sm:$0xff] %vm63, %v1024
  %1057 = vst.msk [vmem:[%s5 + $0x88] sm:$0xff] %vm63, %v1025
  %1058 = vst.msk [vmem:[%s5 + $0x90] sm:$0xff] %vm63, %v1026
  %1059 = vst.msk [vmem:[%s5 + $0x98] sm:$0xff] %vm63, %v1027
  %1060 = vst.msk [vmem:[%s5 + $0xa0] sm:$0xff] %vm63, %v1028
  %1061 = vst.msk [vmem:[%s5 + $0xa8] sm:$0xff] %vm63, %v1029
  %1062 = vst.msk [vmem:[%s5 + $0xb0] sm:$0xff] %vm63, %v1030
  %1063 = vst.msk [vmem:[%s5 + $0xb8] sm:$0xff] %vm63, %v1031
  %1064 = vst.msk [vmem:[%s5 + $0xc0] sm:$0xff] %vm63, %v1032
  %1065 = vst.msk [vmem:[%s5 + $0xc8] sm:$0xff] %vm63, %v1033
  %1066 = vst.msk [vmem:[%s5 + $0xd0] sm:$0xff] %vm63, %v1034
  %1067 = vst.msk [vmem:[%s5 + $0xd8] sm:$0xff] %vm63, %v1035
  %1068 = vst.msk [vmem:[%s5 + $0xe0] sm:$0xff] %vm63, %v1036
  %1069 = vst.msk [vmem:[%s5 + $0xe8] sm:$0xff] %vm63, %v1037
  %1070 = vst.msk [vmem:[%s5 + $0xf0] sm:$0xff] %vm63, %v1038
  %1071 = vst.msk [vmem:[%s5 + $0xf8] sm:$0xff] %vm63, %v1039
  // Predicated region
  $region22: #{tpu_custom_call.1} parent=0 // pred_check
    _
  $region23: #{tpu_custom_call.1} parent=0 // pred_check_branch
    %1073 = sbr.rel (0) target = $region25
  $region24: #{tpu_custom_call.1} parent=0 // pred_region
    _
  $region25: #{tpu_custom_call.1} parent=0 // pred_fallthru
    _
  // Predicated region
  $region26: #{tpu_custom_call.1} parent=0 // pred_check
    _
  $region27: #{tpu_custom_call.1} parent=0 // pred_check_branch
    %1075 = sbr.rel (0) target = $region29
  $region28: #{tpu_custom_call.1} parent=0 // pred_region
    _
  $region29: #{tpu_custom_call.1} parent=0 // pred_fallthru
    _

</llo_original>
